<compile_context>
chip_gen: v5e
topology: v5e:2x2
jax: 0.10.0
libtpu: 0.0.40
codegen_flags: <defaults>
</compile_context>

<pallas_src>
import jax
import jax.numpy as jnp
from jax import lax
from jax.experimental import pallas as pl
from jax.experimental.pallas import tpu as pltpu

# --- problem sizes (small, consistent with an image classifier input) ---
B, C_IN, H, W = 2, 4, 16, 16          # x: (2, 4, 16, 16) NCHW
FEAT = C_IN * H * W                    # 1024
LANE = 128                             # TPU lane width
N_CHUNKS = FEAT // LANE                # 8
NUM_CLASSES = 10
NUM_CENTERS = 8
TEMP = 0.1                             # must be > 0 (monotone -> argmin safe)


def _qclassifier_kernel(centers_ref, x_ref, b_ref, w_hbm_ref, out_ref,
                        w_vmem, w_sem):
    """centers_ref: SMEM (NUM_CENTERS,) f32
       x_ref:     VMEM (B, N_CHUNKS, LANE) f32       -- dense (8,128) tiles
       b_ref:     VMEM (1, NUM_CLASSES) f32
       w_hbm_ref: ANY/HBM (NUM_CLASSES, FEAT) f32    -- transposed weight
       out_ref:   VMEM (B, NUM_CLASSES) f32
       w_vmem:    VMEM scratch (NUM_CLASSES, FEAT) f32
       w_sem:     DMA semaphore (1,)
    """
    # Kick off the weight fetch first so it overlaps with the quantize.
    w_copy = pltpu.make_async_copy(w_hbm_ref, w_vmem, w_sem.at[0])
    w_copy.start()

    x = x_ref[...]                                    # (B, 8, 128), dense vregs

    # --- nearest-center quantization (argmin of squared distance) ---
    # `/ temp` dropped: for temp > 0 it is a monotone rescale, argmin unchanged.
    # Strict `<` keeps the first minimum, matching torch.argmin tie-breaking.
    # All SMEM scalar reads happen before the DMA wait (keeps sst->sld fwd).
    c0 = jnp.full(x.shape, centers_ref[0], dtype=x.dtype)   # peeled center 0
    diff = x - c0
    best_d = diff * diff
    best_v = c0
    for c in range(1, NUM_CENTERS):                   # static unrolled loop
        cv = jnp.full(x.shape, centers_ref[c], dtype=x.dtype)  # one broadcast
        diff = x - cv
        d = diff * diff
        take = d < best_d
        best_v = jnp.where(take, cv, best_v)
        best_d = jnp.where(take, d, best_d)
    qx = best_v                                       # (B, 8, 128), quantized x

    # Weight must be resident before the classifier dots.
    w_copy.wait()

    # --- linear head: accumulate rhs-transposed dots over the 8 chunks ---
    dims = (((1,), (1,)), ((), ()))                   # contract lane dim of both
    acc = lax.dot_general(qx[:, 0, :], w_vmem[:, pl.ds(0, LANE)],
                          dimension_numbers=dims,
                          preferred_element_type=jnp.float32)
    for i in range(1, N_CHUNKS):
        q_i = qx[:, i, :]                             # (B, 128)
        w_i = w_vmem[:, pl.ds(i * LANE, LANE)]        # (NUM_CLASSES, 128), aligned
        acc = acc + lax.dot_general(q_i, w_i, dimension_numbers=dims,
                                    preferred_element_type=jnp.float32)
    out_ref[...] = acc + b_ref[...]                   # (B, NUM_CLASSES)


def prepare_params(w, b):
    """One-time parameter preparation (hoisted out of the per-call forward).
    w: (FEAT, NUM_CLASSES) -> transposed (NUM_CLASSES, FEAT), lane-dense over FEAT.
    b: (NUM_CLASSES,)      -> (1, NUM_CLASSES) row for an in-kernel broadcast add.
    """
    return jnp.asarray(w).T, jnp.asarray(b).reshape(1, NUM_CLASSES)


@jax.jit
def quantized_classifier_fwd(x_nchw, centers, w_t, b_row):
    """x_nchw: (B, C, H, W) f32; centers: (NUM_CENTERS, 1) f32;
       w_t: (NUM_CLASSES, FEAT) f32 (pre-transposed); b_row: (1, NUM_CLASSES) f32."""
    x3 = x_nchw.reshape(B, N_CHUNKS, LANE)            # free row-major reshape
    centers_flat = centers.reshape(NUM_CENTERS)

    grid_spec = pltpu.PrefetchScalarGridSpec(
        num_scalar_prefetch=0,
        grid=(1,),
        in_specs=[
            pl.BlockSpec(memory_space=pltpu.SMEM),                    # centers
            pl.BlockSpec((B, N_CHUNKS, LANE), lambda i: (0, 0, 0)),   # x
            pl.BlockSpec((1, NUM_CLASSES), lambda i: (0, 0)),         # bias
            pl.BlockSpec(memory_space=pl.ANY),                        # weight (HBM)
        ],
        out_specs=pl.BlockSpec((B, NUM_CLASSES), lambda i: (0, 0)),
        scratch_shapes=[
            pltpu.VMEM((NUM_CLASSES, FEAT), jnp.float32),   # weight landing buffer
            pltpu.SemaphoreType.DMA((1,)),                  # weight DMA semaphore
        ],
    )

    return pl.pallas_call(
        _qclassifier_kernel,
        out_shape=jax.ShapeDtypeStruct((B, NUM_CLASSES), jnp.float32),
        grid_spec=grid_spec,
        compiler_params=pltpu.CompilerParams(
            dimension_semantics=("arbitrary",)
        ),
    )(centers_flat, x3, b_row, w_t)


def _reference(x_nchw, centers, w, b):
    """Pure-JAX replica of the PyTorch forward for validation."""
    xf = x_nchw.reshape(-1, 1)                                     # (N, 1)
    dists = jnp.sum((xf[:, None, :] - centers[None, :, :]) ** 2,   # (N, C)
                    axis=-1) / TEMP
    mins = jnp.argmin(dists, axis=1)                               # first min
    onehot = jax.nn.one_hot(mins, NUM_CENTERS, dtype=xf.dtype)     # (N, C)
    qx = (onehot @ centers).reshape(x_nchw.shape)                  # (B,C,H,W)
    return qx.reshape(B, FEAT) @ w + b[None, :]


if __name__ == "__main__":
    assert TEMP > 0.0, "temp must be > 0 for the argmin-preserving rescale"

    key = jax.random.PRNGKey(0)
    kx, kc, kw, kb = jax.random.split(key, 4)

    x = jax.random.normal(kx, (B, C_IN, H, W), dtype=jnp.float32)
    # deterministic, well-separated centers (shape (C, 1) like the torch code)
    centers = jnp.linspace(-2.0, 2.0, NUM_CENTERS,
                           dtype=jnp.float32).reshape(NUM_CENTERS, 1)
    w = jax.random.normal(kw, (FEAT, NUM_CLASSES), dtype=jnp.float32) * 0.02
    b = jax.random.normal(kb, (NUM_CLASSES,), dtype=jnp.float32) * 0.01

    # One-time parameter prep (kept out of the per-call forward path).
    w_t, b_row = prepare_params(w, b)

    out = quantized_classifier_fwd(x, centers, w_t, b_row)
    out = jax.block_until_ready(out)

    ref = _reference(x, centers, w, b)
    assert out.shape == (B, NUM_CLASSES)
    assert jnp.allclose(out, ref, atol=1e-4, rtol=1e-4)

    print("KERNEL_OK")
</pallas_src>

<mosaic_0001>
module attributes {stable_mosaic.version = 11 : i64} {
  func.func @_qclassifier_kernel(%arg0: i32, %arg1: memref<8xf32, #tpu.memory_space<smem>>, %arg2: memref<2x8x128xf32, #tpu.memory_space<vmem>>, %arg3: memref<1x10xf32, #tpu.memory_space<vmem>>, %arg4: memref<10x1024xf32, #tpu.memory_space<any>>, %arg5: memref<2x10xf32, #tpu.memory_space<vmem>>, %arg6: memref<10x1024xf32, #tpu.memory_space<vmem>>, %arg7: memref<1x!tpu.dma_semaphore, #tpu.memory_space<semaphore_mem>>) attributes {dimension_semantics = [#tpu.dimension_semantics<arbitrary>], iteration_bounds = array<i64: 1>, scalar_prefetch = 0 : i64, scratch_operands = 2 : i64, tpu.core_type = #tpu.core_type<tc>, window_params = [{transform_indices = @transform_0, window_bounds = array<i64: 8>}, {pipeline_mode = #tpu.pipeline_mode<synchronous>, transform_indices = @transform_1, window_bounds = array<i64: 2, 8, 128>}, {pipeline_mode = #tpu.pipeline_mode<synchronous>, transform_indices = @transform_2, window_bounds = array<i64: 1, 10>}, {}, {pipeline_mode = #tpu.pipeline_mode<synchronous>, transform_indices = @transform_4, window_bounds = array<i64: 2, 10>}]} {
    %c0_i32 = arith.constant 0 : i32
    %0 = tpu.memref_slice %arg7[%c0_i32] : memref<1x!tpu.dma_semaphore, #tpu.memory_space<semaphore_mem>> -> memref<1x!tpu.dma_semaphore, #tpu.memory_space<semaphore_mem>>
    %1 = tpu.memref_squeeze %0 : memref<1x!tpu.dma_semaphore, #tpu.memory_space<semaphore_mem>> -> memref<!tpu.dma_semaphore, #tpu.memory_space<semaphore_mem>>
    tpu.enqueue_dma source(%arg4 : memref<10x1024xf32, #tpu.memory_space<any>>) target(%arg6 : memref<10x1024xf32, #tpu.memory_space<vmem>>) target_semaphore(%1 : memref<!tpu.dma_semaphore, #tpu.memory_space<semaphore_mem>>)
    %c0 = arith.constant 0 : index
    %c0_0 = arith.constant 0 : index
    %c0_1 = arith.constant 0 : index
    %2 = vector.load %arg2[%c0, %c0_0, %c0_1] : memref<2x8x128xf32, #tpu.memory_space<vmem>>, vector<2x8x128xf32>
    %c0_2 = arith.constant 0 : index
    %3 = memref.load %arg1[%c0_2] : memref<8xf32, #tpu.memory_space<smem>>
    %4 = vector.broadcast %3 : f32 to vector<2x8x128xf32>
    %5 = arith.subf %2, %4 : vector<2x8x128xf32>
    %6 = arith.mulf %5, %5 : vector<2x8x128xf32>
    %c1 = arith.constant 1 : index
    %7 = memref.load %arg1[%c1] : memref<8xf32, #tpu.memory_space<smem>>
    %8 = vector.broadcast %7 : f32 to vector<2x8x128xf32>
    %9 = arith.subf %2, %8 : vector<2x8x128xf32>
    %10 = arith.mulf %9, %9 : vector<2x8x128xf32>
    %11 = arith.cmpf olt, %10, %6 : vector<2x8x128xf32>
    %12 = arith.select %11, %8, %4 : vector<2x8x128xi1>, vector<2x8x128xf32>
    %13 = arith.select %11, %10, %6 : vector<2x8x128xi1>, vector<2x8x128xf32>
    %c2 = arith.constant 2 : index
    %14 = memref.load %arg1[%c2] : memref<8xf32, #tpu.memory_space<smem>>
    %15 = vector.broadcast %14 : f32 to vector<2x8x128xf32>
    %16 = arith.subf %2, %15 : vector<2x8x128xf32>
    %17 = arith.mulf %16, %16 : vector<2x8x128xf32>
    %18 = arith.cmpf olt, %17, %13 : vector<2x8x128xf32>
    %19 = arith.select %18, %15, %12 : vector<2x8x128xi1>, vector<2x8x128xf32>
    %20 = arith.select %18, %17, %13 : vector<2x8x128xi1>, vector<2x8x128xf32>
    %c3 = arith.constant 3 : index
    %21 = memref.load %arg1[%c3] : memref<8xf32, #tpu.memory_space<smem>>
    %22 = vector.broadcast %21 : f32 to vector<2x8x128xf32>
    %23 = arith.subf %2, %22 : vector<2x8x128xf32>
    %24 = arith.mulf %23, %23 : vector<2x8x128xf32>
    %25 = arith.cmpf olt, %24, %20 : vector<2x8x128xf32>
    %26 = arith.select %25, %22, %19 : vector<2x8x128xi1>, vector<2x8x128xf32>
    %27 = arith.select %25, %24, %20 : vector<2x8x128xi1>, vector<2x8x128xf32>
    %c4 = arith.constant 4 : index
    %28 = memref.load %arg1[%c4] : memref<8xf32, #tpu.memory_space<smem>>
    %29 = vector.broadcast %28 : f32 to vector<2x8x128xf32>
    %30 = arith.subf %2, %29 : vector<2x8x128xf32>
    %31 = arith.mulf %30, %30 : vector<2x8x128xf32>
    %32 = arith.cmpf olt, %31, %27 : vector<2x8x128xf32>
    %33 = arith.select %32, %29, %26 : vector<2x8x128xi1>, vector<2x8x128xf32>
    %34 = arith.select %32, %31, %27 : vector<2x8x128xi1>, vector<2x8x128xf32>
    %c5 = arith.constant 5 : index
    %35 = memref.load %arg1[%c5] : memref<8xf32, #tpu.memory_space<smem>>
    %36 = vector.broadcast %35 : f32 to vector<2x8x128xf32>
    %37 = arith.subf %2, %36 : vector<2x8x128xf32>
    %38 = arith.mulf %37, %37 : vector<2x8x128xf32>
    %39 = arith.cmpf olt, %38, %34 : vector<2x8x128xf32>
    %40 = arith.select %39, %36, %33 : vector<2x8x128xi1>, vector<2x8x128xf32>
    %41 = arith.select %39, %38, %34 : vector<2x8x128xi1>, vector<2x8x128xf32>
    %c6 = arith.constant 6 : index
    %42 = memref.load %arg1[%c6] : memref<8xf32, #tpu.memory_space<smem>>
    %43 = vector.broadcast %42 : f32 to vector<2x8x128xf32>
    %44 = arith.subf %2, %43 : vector<2x8x128xf32>
    %45 = arith.mulf %44, %44 : vector<2x8x128xf32>
    %46 = arith.cmpf olt, %45, %41 : vector<2x8x128xf32>
    %47 = arith.select %46, %43, %40 : vector<2x8x128xi1>, vector<2x8x128xf32>
    %48 = arith.select %46, %45, %41 : vector<2x8x128xi1>, vector<2x8x128xf32>
    %c7 = arith.constant 7 : index
    %49 = memref.load %arg1[%c7] : memref<8xf32, #tpu.memory_space<smem>>
    %50 = vector.broadcast %49 : f32 to vector<2x8x128xf32>
    %51 = arith.subf %2, %50 : vector<2x8x128xf32>
    %52 = arith.mulf %51, %51 : vector<2x8x128xf32>
    %53 = arith.cmpf olt, %52, %48 : vector<2x8x128xf32>
    %54 = arith.select %53, %50, %47 : vector<2x8x128xi1>, vector<2x8x128xf32>
    %c0_i32_3 = arith.constant 0 : i32
    %55 = tpu.memref_slice %arg7[%c0_i32_3] : memref<1x!tpu.dma_semaphore, #tpu.memory_space<semaphore_mem>> -> memref<1x!tpu.dma_semaphore, #tpu.memory_space<semaphore_mem>>
    %56 = tpu.memref_squeeze %55 : memref<1x!tpu.dma_semaphore, #tpu.memory_space<semaphore_mem>> -> memref<!tpu.dma_semaphore, #tpu.memory_space<semaphore_mem>>
    tpu.wait_dma2 semaphore(%56 : memref<!tpu.dma_semaphore, #tpu.memory_space<semaphore_mem>>) src(%arg4 : memref<10x1024xf32, #tpu.memory_space<any>>) dst(%arg6 : memref<10x1024xf32, #tpu.memory_space<vmem>>)
    %57 = vector.extract_strided_slice %54 {offsets = [0, 0, 0], sizes = [2, 1, 128], strides = [1, 1, 1]} : vector<2x8x128xf32> to vector<2x1x128xf32>
    %58 = vector.shape_cast %57 : vector<2x1x128xf32> to vector<2x128xf32>
    %c0_4 = arith.constant 0 : index
    %c0_5 = arith.constant 0 : index
    %59 = vector.load %arg6[%c0_4, %c0_5] : memref<10x1024xf32, #tpu.memory_space<vmem>>, vector<10x128xf32>
    %cst = arith.constant dense<0.000000e+00> : vector<2x10xf32>
    %60 = tpu.matmul %58, %59, %cst {dimension_numbers = #tpu.dot_dimension_numbers<[1], [1], [0], [0], [0, 0, 1, 0], [], []>} : vector<2x128xf32>, vector<10x128xf32>, vector<2x10xf32> -> vector<2x10xf32>
    %61 = vector.extract_strided_slice %54 {offsets = [0, 1, 0], sizes = [2, 1, 128], strides = [1, 1, 1]} : vector<2x8x128xf32> to vector<2x1x128xf32>
    %62 = vector.shape_cast %61 : vector<2x1x128xf32> to vector<2x128xf32>
    %c0_6 = arith.constant 0 : index
    %c128 = arith.constant 128 : index
    %63 = vector.load %arg6[%c0_6, %c128] : memref<10x1024xf32, #tpu.memory_space<vmem>>, vector<10x128xf32>
    %cst_7 = arith.constant dense<0.000000e+00> : vector<2x10xf32>
    %64 = tpu.matmul %62, %63, %cst_7 {dimension_numbers = #tpu.dot_dimension_numbers<[1], [1], [0], [0], [0, 0, 1, 0], [], []>} : vector<2x128xf32>, vector<10x128xf32>, vector<2x10xf32> -> vector<2x10xf32>
    %65 = arith.addf %60, %64 : vector<2x10xf32>
    %66 = vector.extract_strided_slice %54 {offsets = [0, 2, 0], sizes = [2, 1, 128], strides = [1, 1, 1]} : vector<2x8x128xf32> to vector<2x1x128xf32>
    %67 = vector.shape_cast %66 : vector<2x1x128xf32> to vector<2x128xf32>
    %c0_8 = arith.constant 0 : index
    %c256 = arith.constant 256 : index
    %68 = vector.load %arg6[%c0_8, %c256] : memref<10x1024xf32, #tpu.memory_space<vmem>>, vector<10x128xf32>
    %cst_9 = arith.constant dense<0.000000e+00> : vector<2x10xf32>
    %69 = tpu.matmul %67, %68, %cst_9 {dimension_numbers = #tpu.dot_dimension_numbers<[1], [1], [0], [0], [0, 0, 1, 0], [], []>} : vector<2x128xf32>, vector<10x128xf32>, vector<2x10xf32> -> vector<2x10xf32>
    %70 = arith.addf %65, %69 : vector<2x10xf32>
    %71 = vector.extract_strided_slice %54 {offsets = [0, 3, 0], sizes = [2, 1, 128], strides = [1, 1, 1]} : vector<2x8x128xf32> to vector<2x1x128xf32>
    %72 = vector.shape_cast %71 : vector<2x1x128xf32> to vector<2x128xf32>
    %c0_10 = arith.constant 0 : index
    %c384 = arith.constant 384 : index
    %73 = vector.load %arg6[%c0_10, %c384] : memref<10x1024xf32, #tpu.memory_space<vmem>>, vector<10x128xf32>
    %cst_11 = arith.constant dense<0.000000e+00> : vector<2x10xf32>
    %74 = tpu.matmul %72, %73, %cst_11 {dimension_numbers = #tpu.dot_dimension_numbers<[1], [1], [0], [0], [0, 0, 1, 0], [], []>} : vector<2x128xf32>, vector<10x128xf32>, vector<2x10xf32> -> vector<2x10xf32>
    %75 = arith.addf %70, %74 : vector<2x10xf32>
    %76 = vector.extract_strided_slice %54 {offsets = [0, 4, 0], sizes = [2, 1, 128], strides = [1, 1, 1]} : vector<2x8x128xf32> to vector<2x1x128xf32>
    %77 = vector.shape_cast %76 : vector<2x1x128xf32> to vector<2x128xf32>
    %c0_12 = arith.constant 0 : index
    %c512 = arith.constant 512 : index
    %78 = vector.load %arg6[%c0_12, %c512] : memref<10x1024xf32, #tpu.memory_space<vmem>>, vector<10x128xf32>
    %cst_13 = arith.constant dense<0.000000e+00> : vector<2x10xf32>
    %79 = tpu.matmul %77, %78, %cst_13 {dimension_numbers = #tpu.dot_dimension_numbers<[1], [1], [0], [0], [0, 0, 1, 0], [], []>} : vector<2x128xf32>, vector<10x128xf32>, vector<2x10xf32> -> vector<2x10xf32>
    %80 = arith.addf %75, %79 : vector<2x10xf32>
    %81 = vector.extract_strided_slice %54 {offsets = [0, 5, 0], sizes = [2, 1, 128], strides = [1, 1, 1]} : vector<2x8x128xf32> to vector<2x1x128xf32>
    %82 = vector.shape_cast %81 : vector<2x1x128xf32> to vector<2x128xf32>
    %c0_14 = arith.constant 0 : index
    %c640 = arith.constant 640 : index
    %83 = vector.load %arg6[%c0_14, %c640] : memref<10x1024xf32, #tpu.memory_space<vmem>>, vector<10x128xf32>
    %cst_15 = arith.constant dense<0.000000e+00> : vector<2x10xf32>
    %84 = tpu.matmul %82, %83, %cst_15 {dimension_numbers = #tpu.dot_dimension_numbers<[1], [1], [0], [0], [0, 0, 1, 0], [], []>} : vector<2x128xf32>, vector<10x128xf32>, vector<2x10xf32> -> vector<2x10xf32>
    %85 = arith.addf %80, %84 : vector<2x10xf32>
    %86 = vector.extract_strided_slice %54 {offsets = [0, 6, 0], sizes = [2, 1, 128], strides = [1, 1, 1]} : vector<2x8x128xf32> to vector<2x1x128xf32>
    %87 = vector.shape_cast %86 : vector<2x1x128xf32> to vector<2x128xf32>
    %c0_16 = arith.constant 0 : index
    %c768 = arith.constant 768 : index
    %88 = vector.load %arg6[%c0_16, %c768] : memref<10x1024xf32, #tpu.memory_space<vmem>>, vector<10x128xf32>
    %cst_17 = arith.constant dense<0.000000e+00> : vector<2x10xf32>
    %89 = tpu.matmul %87, %88, %cst_17 {dimension_numbers = #tpu.dot_dimension_numbers<[1], [1], [0], [0], [0, 0, 1, 0], [], []>} : vector<2x128xf32>, vector<10x128xf32>, vector<2x10xf32> -> vector<2x10xf32>
    %90 = arith.addf %85, %89 : vector<2x10xf32>
    %91 = vector.extract_strided_slice %54 {offsets = [0, 7, 0], sizes = [2, 1, 128], strides = [1, 1, 1]} : vector<2x8x128xf32> to vector<2x1x128xf32>
    %92 = vector.shape_cast %91 : vector<2x1x128xf32> to vector<2x128xf32>
    %c0_18 = arith.constant 0 : index
    %c896 = arith.constant 896 : index
    %93 = vector.load %arg6[%c0_18, %c896] : memref<10x1024xf32, #tpu.memory_space<vmem>>, vector<10x128xf32>
    %cst_19 = arith.constant dense<0.000000e+00> : vector<2x10xf32>
    %94 = tpu.matmul %92, %93, %cst_19 {dimension_numbers = #tpu.dot_dimension_numbers<[1], [1], [0], [0], [0, 0, 1, 0], [], []>} : vector<2x128xf32>, vector<10x128xf32>, vector<2x10xf32> -> vector<2x10xf32>
    %95 = arith.addf %90, %94 : vector<2x10xf32>
    %c0_20 = arith.constant 0 : index
    %c0_21 = arith.constant 0 : index
    %96 = vector.load %arg3[%c0_20, %c0_21] : memref<1x10xf32, #tpu.memory_space<vmem>>, vector<1x10xf32>
    %97 = vector.broadcast %96 : vector<1x10xf32> to vector<2x10xf32>
    %98 = arith.addf %95, %97 : vector<2x10xf32>
    %c0_22 = arith.constant 0 : index
    %c0_23 = arith.constant 0 : index
    %99 = vector.load %arg5[%c0_22, %c0_23] : memref<2x10xf32, #tpu.memory_space<vmem>>, vector<2x10xf32>
    tpu.vector_store %arg5[%c0_22, %c0_23], %98 {strides = array<i32>} : memref<2x10xf32, #tpu.memory_space<vmem>>, vector<2x10xf32>,
    return
  }
  func.func @transform_0(%arg0: i32) -> i32 {
    %c0_i32 = arith.constant 0 : i32
    %c0_i32_0 = arith.constant 0 : i32
    return %c0_i32 : i32
  }
  func.func @transform_1(%arg0: i32) -> (i32, i32, i32) {
    %c0_i32 = arith.constant 0 : i32
    %c0_i32_0 = arith.constant 0 : i32
    %c0_i32_1 = arith.constant 0 : i32
    %c0_i32_2 = arith.constant 0 : i32
    return %c0_i32, %c0_i32_0, %c0_i32_1 : i32, i32, i32
  }
  func.func @transform_2(%arg0: i32) -> (i32, i32) {
    %c0_i32 = arith.constant 0 : i32
    %c0_i32_0 = arith.constant 0 : i32
    %c0_i32_1 = arith.constant 0 : i32
    return %c0_i32, %c0_i32_0 : i32, i32
  }
  func.func @transform_4(%arg0: i32) -> (i32, i32) {
    %c0_i32 = arith.constant 0 : i32
    %c0_i32_0 = arith.constant 0 : i32
    %c0_i32_1 = arith.constant 0 : i32
    return %c0_i32, %c0_i32_0 : i32, i32
  }
}

</mosaic_0001>

<llo_original>
// kernel: quantized_classifier_fwd.1
$region0: #{quantized_classifier_fwd.1}
  #allocation0 [shape = 'u32[]', space=smem, size = 0x4, offset = 0x4, fixed_abs, tag = 'smem constant byte address 0x4 - core index']
  #allocation1 [shape = 'u32[72,128]{1,0:T(1,128)}', space=vmem, size = 0x9000, scoped, tag = 'internal scratch']
  #allocation2 [shape = 'f32[10,1024]{1,0:T(8,128)}', space=vmem, size = 0x10000, scoped, tag = 'scratch operand']
  #allocation3 [shape = 's32[1]{0}', space=sflag, size = 0x4, scoped, tag = 'scratch operand']
  #allocation8 [shape = 's32[]', space=sflag, size = 0x4, offset = 0, fixed_abs, tag = 'sflag constant byte address 0x0 - dummy sync flag']
  %s0 = inlined_call_operand.vmem [shape: f32[8], index: 0, kind: input, shape index: {}]
  %s1 = inlined_call_operand.vmem [shape: f32[2,8,128], index: 1, kind: input, shape index: {}]
  %s2 = inlined_call_operand.vmem [shape: f32[1,10], index: 2, kind: input, shape index: {}]
  %s3 = inlined_call_operand.vmem [shape: f32[10,1024], index: 3, kind: input, shape index: {}]
  %s4 = inlined_call_operand.hbm [shape: f32[2,10], index: 4, kind: output, shape index: {}]
  %s5 = sld [smem:[#allocation0]]
  $region45: #{quantized_classifier_fwd.1} parent=0
    _
  %s7 = ssub.s32 1, %s5
  %s8 = scalar_select 0, %s7, %s5
  $region1: #{quantized_classifier_fwd.1} parent=0
    #allocation4 [shape = 'u8[512]{0}', space=smem, size = 0x200, scoped, tag = 'input window, operand 0, single buffered']
    #allocation5 [shape = 's32[1]{0}', space=sflag, size = 0x4, scoped, tag = 'scoped memory for quantized_classifier_fwd.1']
    #allocation6 [shape = 's32[1]{0}', space=sflag, size = 0x4, scoped, tag = 'scoped memory for quantized_classifier_fwd.1']
    #allocation7 [shape = 'u8[1024]{0}', space=vmem, size = 0x400, scoped, tag = 'output window, operand 0, single buffered']
    %9 = vsyncpa [#allocation6], 0
    %10 = vsyncpa [#allocation5], 0
    // Predicated region
    $region2: #{quantized_classifier_fwd.1} parent=1 // pred_check
      _
    $region3: #{quantized_classifier_fwd.1} parent=1 // pred_check_branch
      %12 = sbr.rel (0) target = $region5
    $region4: #{quantized_classifier_fwd.1} parent=1 // pred_region
      %14 = vsyncadd [#allocation6], 0
      %s16 = sshll.u32 %s0, 4
      %s17 = int_to_ptr.vmem [resolvable:$true] %s16
      %19 = dma.vmem_to_smem %s17, 16, [#allocation4], [#allocation6]
    $region5: #{quantized_classifier_fwd.1} parent=1 // pred_fallthru
      _
    // Predicated region
    $region6: #{quantized_classifier_fwd.1} parent=1 // pred_check
      _
    $region7: #{quantized_classifier_fwd.1} parent=1 // pred_check_branch
      %21 = sbr.rel (0) target = $region9
    $region8: #{quantized_classifier_fwd.1} parent=1 // pred_region
      _
    $region9: #{quantized_classifier_fwd.1} parent=1 // pred_fallthru
      _
    // Predicated region
    $region10: #{quantized_classifier_fwd.1} parent=1 // pred_check
      _
    $region11: #{quantized_classifier_fwd.1} parent=1 // pred_check_branch
      %23 = sbr.rel (0) target = $region13
    $region12: #{quantized_classifier_fwd.1} parent=1 // pred_region
      _
    $region13: #{quantized_classifier_fwd.1} parent=1 // pred_fallthru
      _
    // Predicated region
    $region14: #{quantized_classifier_fwd.1} parent=1 // pred_check
      _
    $region15: #{quantized_classifier_fwd.1} parent=1 // pred_check_branch
      %25 = sbr.rel (0) target = $region17
    $region16: #{quantized_classifier_fwd.1} parent=1 // pred_region
      %27 = dma.done [#allocation6], 16
    $region17: #{quantized_classifier_fwd.1} parent=1 // pred_fallthru
      _
    %28 = sfence
    // Predicated region
    $region18: #{quantized_classifier_fwd.1} parent=1 // pred_check
      _
    $region19: #{quantized_classifier_fwd.1} parent=1 // pred_check_branch
      %30 = sbr.rel (0) target = $region21
    $region20: #{quantized_classifier_fwd.1} parent=1 // pred_region
      loop: start=0, step=1, limit=1
      $region22: #{quantized_classifier_fwd.1} parent=20 // loop_pre_header
        _
      $region23: #{quantized_classifier_fwd.1} parent=20 // loop_header
        %s32 = sphi 0, %s36
        %p33 = scmp.ge.s32.totalorder %s32, 1
        %s37 = sphi %s3, %s3
        %s38 = sphi [#allocation2], [#allocation2]
      $region24: #{quantized_classifier_fwd.1} parent=20 // loop_header_branch
        %35 = sbr.rel (%p33) target = $region28
      $region25: #{quantized_classifier_fwd.1} parent=20 // loop_body
        %v39 = vld [vmem:[%s37] sm:$0xff]
        %40 = vst [vmem:[%s38] sm:$0xff] %v39
        %v41 = vld [vmem:[%s37 + $0x8] sm:$0xff]
        %42 = vst [vmem:[%s38 + $0x8] sm:$0xff] %v41
        %v43 = vld [vmem:[%s37 + $0x10] sm:$0xff]
        %44 = vst [vmem:[%s38 + $0x10] sm:$0xff] %v43
        %v45 = vld [vmem:[%s37 + $0x18] sm:$0xff]
        %46 = vst [vmem:[%s38 + $0x18] sm:$0xff] %v45
        %v47 = vld [vmem:[%s37 + $0x20] sm:$0xff]
        %48 = vst [vmem:[%s38 + $0x20] sm:$0xff] %v47
        %v49 = vld [vmem:[%s37 + $0x28] sm:$0xff]
        %50 = vst [vmem:[%s38 + $0x28] sm:$0xff] %v49
        %v51 = vld [vmem:[%s37 + $0x30] sm:$0xff]
        %52 = vst [vmem:[%s38 + $0x30] sm:$0xff] %v51
        %v53 = vld [vmem:[%s37 + $0x38] sm:$0xff]
        %54 = vst [vmem:[%s38 + $0x38] sm:$0xff] %v53
        %v55 = vld [vmem:[%s37 + $0x40] sm:$0xff]
        %56 = vst [vmem:[%s38 + $0x40] sm:$0xff] %v55
        %v57 = vld [vmem:[%s37 + $0x48] sm:$0xff]
        %58 = vst [vmem:[%s38 + $0x48] sm:$0xff] %v57
        %v59 = vld [vmem:[%s37 + $0x50] sm:$0xff]
        %60 = vst [vmem:[%s38 + $0x50] sm:$0xff] %v59
        %v61 = vld [vmem:[%s37 + $0x58] sm:$0xff]
        %62 = vst [vmem:[%s38 + $0x58] sm:$0xff] %v61
        %v63 = vld [vmem:[%s37 + $0x60] sm:$0xff]
        %64 = vst [vmem:[%s38 + $0x60] sm:$0xff] %v63
        %v65 = vld [vmem:[%s37 + $0x68] sm:$0xff]
        %66 = vst [vmem:[%s38 + $0x68] sm:$0xff] %v65
        %v67 = vld [vmem:[%s37 + $0x70] sm:$0xff]
        %68 = vst [vmem:[%s38 + $0x70] sm:$0xff] %v67
        %v69 = vld [vmem:[%s37 + $0x78] sm:$0xff]
        %70 = vst [vmem:[%s38 + $0x78] sm:$0xff] %v69
      $region26: #{quantized_classifier_fwd.1} parent=20 // loop_footer
        %s36 = sadd.s32 1, %s32
      $region27: #{quantized_classifier_fwd.1} parent=20 // loop_footer_branch
        %31 = sbr.rel target = $region23
      $region28: #{quantized_classifier_fwd.1} parent=20 // loop_exit
        _
    $region21: #{quantized_classifier_fwd.1} parent=1 // pred_fallthru
      _
    // Predicated region
    $region29: #{quantized_classifier_fwd.1} parent=1 // pred_check
      _
    $region30: #{quantized_classifier_fwd.1} parent=1 // pred_check_branch
      %72 = sbr.rel target = $region32
    $region31: #{quantized_classifier_fwd.1} parent=1 // pred_region
      _
    $region32: #{quantized_classifier_fwd.1} parent=1 // pred_fallthru
      _
    // Predicated region
    $region33: #{quantized_classifier_fwd.1} parent=1 // pred_check
      _
    $region34: #{quantized_classifier_fwd.1} parent=1 // pred_check_branch
      %75 = sbr.rel (0) target = $region36
    $region35: #{quantized_classifier_fwd.1} parent=1 // pred_region
      %76 = vsyncadd [#allocation3], 2048
    $region36: #{quantized_classifier_fwd.1} parent=1 // pred_fallthru
      _
    %v77 = vld [vmem:[%s1] sm:$0xff]
    %v78 = vld [vmem:[%s1 + $0x8] sm:$0xff]
    %s79 = sld [smem:[#allocation4]]
    %v80 = vstv %s79
    %v81 = vsub.f32 %v77, %v80
    %v82 = vsub.f32 %v78, %v80
    %v83 = vmul.f32 %v81, %v81
    %v84 = vmul.f32 %v82, %v82
    %s85 = sld [smem:[#allocation4 + $0x1]]
    %v86 = vstv %s85
    %v87 = vsub.f32 %v77, %v86
    %v88 = vsub.f32 %v78, %v86
    %v89 = vmul.f32 %v87, %v87
    %v90 = vmul.f32 %v88, %v88
    %vm91 = vcmp.lt.f32.partialorder %v89, %v83
    %vm92 = vcmp.lt.f32.partialorder %v90, %v84
    %v93 = vsel %vm91, %v86, %v80
    %v94 = vsel %vm92, %v86, %v80
    %v95 = vsel %vm91, %v89, %v83
    %v96 = vsel %vm92, %v90, %v84
    %s97 = sld [smem:[#allocation4 + $0x2]]
    %v98 = vstv %s97
    %v99 = vsub.f32 %v77, %v98
    %v100 = vsub.f32 %v78, %v98
    %v101 = vmul.f32 %v99, %v99
    %v102 = vmul.f32 %v100, %v100
    %vm103 = vcmp.lt.f32.partialorder %v101, %v95
    %vm104 = vcmp.lt.f32.partialorder %v102, %v96
    %v105 = vsel %vm103, %v98, %v93
    %v106 = vsel %vm104, %v98, %v94
    %v107 = vsel %vm103, %v101, %v95
    %v108 = vsel %vm104, %v102, %v96
    %s109 = sld [smem:[#allocation4 + $0x3]]
    %v110 = vstv %s109
    %v111 = vsub.f32 %v77, %v110
    %v112 = vsub.f32 %v78, %v110
    %v113 = vmul.f32 %v111, %v111
    %v114 = vmul.f32 %v112, %v112
    %vm115 = vcmp.lt.f32.partialorder %v113, %v107
    %vm116 = vcmp.lt.f32.partialorder %v114, %v108
    %v117 = vsel %vm115, %v110, %v105
    %v118 = vsel %vm116, %v110, %v106
    %v119 = vsel %vm115, %v113, %v107
    %v120 = vsel %vm116, %v114, %v108
    %s121 = sld [smem:[#allocation4 + $0x4]]
    %v122 = vstv %s121
    %v123 = vsub.f32 %v77, %v122
    %v124 = vsub.f32 %v78, %v122
    %v125 = vmul.f32 %v123, %v123
    %v126 = vmul.f32 %v124, %v124
    %vm127 = vcmp.lt.f32.partialorder %v125, %v119
    %vm128 = vcmp.lt.f32.partialorder %v126, %v120
    %v129 = vsel %vm127, %v122, %v117
    %v130 = vsel %vm128, %v122, %v118
    %v131 = vsel %vm127, %v125, %v119
    %v132 = vsel %vm128, %v126, %v120
    %s133 = sld [smem:[#allocation4 + $0x5]]
    %v134 = vstv %s133
    %v135 = vsub.f32 %v77, %v134
    %v136 = vsub.f32 %v78, %v134
    %v137 = vmul.f32 %v135, %v135
    %v138 = vmul.f32 %v136, %v136
    %vm139 = vcmp.lt.f32.partialorder %v137, %v131
    %vm140 = vcmp.lt.f32.partialorder %v138, %v132
    %v141 = vsel %vm139, %v134, %v129
    %v142 = vsel %vm140, %v134, %v130
    %v143 = vsel %vm139, %v137, %v131
    %v144 = vsel %vm140, %v138, %v132
    %s145 = sld [smem:[#allocation4 + $0x6]]
    %v146 = vstv %s145
    %v147 = vsub.f32 %v77, %v146
    %v148 = vsub.f32 %v78, %v146
    %v149 = vmul.f32 %v147, %v147
    %v150 = vmul.f32 %v148, %v148
    %vm151 = vcmp.lt.f32.partialorder %v149, %v143
    %vm152 = vcmp.lt.f32.partialorder %v150, %v144
    %v153 = vsel %vm151, %v146, %v141
    %v154 = vsel %vm152, %v146, %v142
    %v155 = vsel %vm151, %v149, %v143
    %v156 = vsel %vm152, %v150, %v144
    %s157 = sld [smem:[#allocation4 + $0x7]]
    %v158 = vstv %s157
    %v159 = vsub.f32 %v77, %v158
    %v160 = vsub.f32 %v78, %v158
    %v161 = vmul.f32 %v159, %v159
    %v162 = vmul.f32 %v160, %v160
    %vm163 = vcmp.lt.f32.partialorder %v161, %v155
    %vm164 = vcmp.lt.f32.partialorder %v162, %v156
    %v165 = vsel %vm163, %v158, %v153
    %v166 = vsel %vm164, %v158, %v154
    %s167 = smul.u32 8, 2
    %s168 = smul.u32 %s167, 8
    %s169 = sshll.u32 %s168, 4
    %170 = dma.done [#allocation3], %s169
    %v171 = vld [vmem:[#allocation2] sm:$0xff]
    %v172 = vld [vmem:[#allocation2 + $0x40] sm:$0x3]
    %v173 = vld [vmem:[#allocation2 + $0x8] sm:$0xff]
    %v174 = vld [vmem:[#allocation2 + $0x48] sm:$0x3]
    %v177 = vrot.slane %v165, 1
    %vm178 = vcmask 1041409
    %v179 = vsel %vm178, %v166, %v177
    %181 = vmatpush.xpose.msra.mxu0 0.0
    %182 = vmatpush.xpose.msra.mxu0 0.0
    %183 = vmatpush.xpose.msra.mxu0 0.0
    %184 = vmatpush.xpose.msra.mxu0 0.0
    %185 = vmatpush.xpose.msra.mxu0 0.0
    %186 = vmatpush.xpose.msra.mxu0 0.0
    %187 = vmatpush.xpose.msra.mxu0 0.0
    %188 = vmatpush.xpose.msra.mxu0 0.0
    %189 = vmatpush.xpose.msra.mxu0 0.0
    %190 = vmatpush.xpose.msra.mxu0 0.0
    %191 = vmatpush.xpose.msra.mxu0 0.0
    %192 = vmatpush.xpose.msra.mxu0 0.0
    %193 = vmatpush.xpose.msra.mxu0 0.0
    %194 = vmatpush.xpose.msra.mxu0 0.0
    %195 = vmatpush.xpose.msra.mxu0 %v174
    %196 = vmatpush.xpose.msra.mxu0 %v173
    %197 = vmatmul.f32.gmra.mxu0 %v179
    %v198 = vpop.f32.mrf.mxu0
    %v199 = vadd.f32 0.0, %v198
    %200 = vdwg.mxu0
    %v201 = vrot.slane %v166, 7
    %v202 = vsel %vm178, %v201, %v165
    %204 = vmatpush.xpose.msra.mxu0 0.0
    %205 = vmatpush.xpose.msra.mxu0 0.0
    %206 = vmatpush.xpose.msra.mxu0 0.0
    %207 = vmatpush.xpose.msra.mxu0 0.0
    %208 = vmatpush.xpose.msra.mxu0 0.0
    %209 = vmatpush.xpose.msra.mxu0 0.0
    %210 = vmatpush.xpose.msra.mxu0 0.0
    %211 = vmatpush.xpose.msra.mxu0 0.0
    %212 = vmatpush.xpose.msra.mxu0 0.0
    %213 = vmatpush.xpose.msra.mxu0 0.0
    %214 = vmatpush.xpose.msra.mxu0 0.0
    %215 = vmatpush.xpose.msra.mxu0 0.0
    %216 = vmatpush.xpose.msra.mxu0 0.0
    %217 = vmatpush.xpose.msra.mxu0 0.0
    %218 = vmatpush.xpose.msra.mxu0 %v172
    %219 = vmatpush.xpose.msra.mxu0 %v171
    %220 = vmatmul.f32.gmra.mxu0 %v202
    %v221 = vpop.f32.mrf.mxu0
    %v222 = vadd.f32 %v199, %v221
    %223 = vdwg.mxu0
    %v224 = vld [vmem:[#allocation2 + $0x10] sm:$0xff]
    %v225 = vld [vmem:[#allocation2 + $0x50] sm:$0x3]
    %v226 = vrot.slane %v165, 2
    %v227 = vrot.slane %v166, 1
    %v228 = vsel %vm178, %v227, %v226
    %230 = vmatpush.xpose.msra.mxu0 0.0
    %231 = vmatpush.xpose.msra.mxu0 0.0
    %232 = vmatpush.xpose.msra.mxu0 0.0
    %233 = vmatpush.xpose.msra.mxu0 0.0
    %234 = vmatpush.xpose.msra.mxu0 0.0
    %235 = vmatpush.xpose.msra.mxu0 0.0
    %236 = vmatpush.xpose.msra.mxu0 0.0
    %237 = vmatpush.xpose.msra.mxu0 0.0
    %238 = vmatpush.xpose.msra.mxu0 0.0
    %239 = vmatpush.xpose.msra.mxu0 0.0
    %240 = vmatpush.xpose.msra.mxu0 0.0
    %241 = vmatpush.xpose.msra.mxu0 0.0
    %242 = vmatpush.xpose.msra.mxu0 0.0
    %243 = vmatpush.xpose.msra.mxu0 0.0
    %244 = vmatpush.xpose.msra.mxu0 %v225
    %245 = vmatpush.xpose.msra.mxu0 %v224
    %246 = vmatmul.f32.gmra.mxu0 %v228
    %v247 = vpop.f32.mrf.mxu0
    %v248 = vadd.f32 0.0, %v247
    %249 = vdwg.mxu0
    %v250 = vadd.f32 %v222, %v248
    %v251 = vld [vmem:[#allocation2 + $0x18] sm:$0xff]
    %v252 = vld [vmem:[#allocation2 + $0x58] sm:$0x3]
    %v253 = vrot.slane %v165, 3
    %v254 = vrot.slane %v166, 2
    %v255 = vsel %vm178, %v254, %v253
    %257 = vmatpush.xpose.msra.mxu0 0.0
    %258 = vmatpush.xpose.msra.mxu0 0.0
    %259 = vmatpush.xpose.msra.mxu0 0.0
    %260 = vmatpush.xpose.msra.mxu0 0.0
    %261 = vmatpush.xpose.msra.mxu0 0.0
    %262 = vmatpush.xpose.msra.mxu0 0.0
    %263 = vmatpush.xpose.msra.mxu0 0.0
    %264 = vmatpush.xpose.msra.mxu0 0.0
    %265 = vmatpush.xpose.msra.mxu0 0.0
    %266 = vmatpush.xpose.msra.mxu0 0.0
    %267 = vmatpush.xpose.msra.mxu0 0.0
    %268 = vmatpush.xpose.msra.mxu0 0.0
    %269 = vmatpush.xpose.msra.mxu0 0.0
    %270 = vmatpush.xpose.msra.mxu0 0.0
    %271 = vmatpush.xpose.msra.mxu0 %v252
    %272 = vmatpush.xpose.msra.mxu0 %v251
    %273 = vmatmul.f32.gmra.mxu0 %v255
    %v274 = vpop.f32.mrf.mxu0
    %v275 = vadd.f32 0.0, %v274
    %276 = vdwg.mxu0
    %v277 = vadd.f32 %v250, %v275
    %v278 = vld [vmem:[#allocation2 + $0x20] sm:$0xff]
    %v279 = vld [vmem:[#allocation2 + $0x60] sm:$0x3]
    %v280 = vrot.slane %v165, 4
    %v281 = vrot.slane %v166, 3
    %v282 = vsel %vm178, %v281, %v280
    %284 = vmatpush.xpose.msra.mxu0 0.0
    %285 = vmatpush.xpose.msra.mxu0 0.0
    %286 = vmatpush.xpose.msra.mxu0 0.0
    %287 = vmatpush.xpose.msra.mxu0 0.0
    %288 = vmatpush.xpose.msra.mxu0 0.0
    %289 = vmatpush.xpose.msra.mxu0 0.0
    %290 = vmatpush.xpose.msra.mxu0 0.0
    %291 = vmatpush.xpose.msra.mxu0 0.0
    %292 = vmatpush.xpose.msra.mxu0 0.0
    %293 = vmatpush.xpose.msra.mxu0 0.0
    %294 = vmatpush.xpose.msra.mxu0 0.0
    %295 = vmatpush.xpose.msra.mxu0 0.0
    %296 = vmatpush.xpose.msra.mxu0 0.0
    %297 = vmatpush.xpose.msra.mxu0 0.0
    %298 = vmatpush.xpose.msra.mxu0 %v279
    %299 = vmatpush.xpose.msra.mxu0 %v278
    %300 = vmatmul.f32.gmra.mxu0 %v282
    %v301 = vpop.f32.mrf.mxu0
    %v302 = vadd.f32 0.0, %v301
    %303 = vdwg.mxu0
    %v304 = vadd.f32 %v277, %v302
    %v305 = vld [vmem:[#allocation2 + $0x28] sm:$0xff]
    %v306 = vld [vmem:[#allocation2 + $0x68] sm:$0x3]
    %v307 = vrot.slane %v165, 5
    %v308 = vrot.slane %v166, 4
    %v309 = vsel %vm178, %v308, %v307
    %311 = vmatpush.xpose.msra.mxu0 0.0
    %312 = vmatpush.xpose.msra.mxu0 0.0
    %313 = vmatpush.xpose.msra.mxu0 0.0
    %314 = vmatpush.xpose.msra.mxu0 0.0
    %315 = vmatpush.xpose.msra.mxu0 0.0
    %316 = vmatpush.xpose.msra.mxu0 0.0
    %317 = vmatpush.xpose.msra.mxu0 0.0
    %318 = vmatpush.xpose.msra.mxu0 0.0
    %319 = vmatpush.xpose.msra.mxu0 0.0
    %320 = vmatpush.xpose.msra.mxu0 0.0
    %321 = vmatpush.xpose.msra.mxu0 0.0
    %322 = vmatpush.xpose.msra.mxu0 0.0
    %323 = vmatpush.xpose.msra.mxu0 0.0
    %324 = vmatpush.xpose.msra.mxu0 0.0
    %325 = vmatpush.xpose.msra.mxu0 %v306
    %326 = vmatpush.xpose.msra.mxu0 %v305
    %327 = vmatmul.f32.gmra.mxu0 %v309
    %v328 = vpop.f32.mrf.mxu0
    %v329 = vadd.f32 0.0, %v328
    %330 = vdwg.mxu0
    %v331 = vadd.f32 %v304, %v329
    %v332 = vld [vmem:[#allocation2 + $0x30] sm:$0xff]
    %v333 = vld [vmem:[#allocation2 + $0x70] sm:$0x3]
    %v334 = vrot.slane %v165, 6
    %v335 = vrot.slane %v166, 5
    %v336 = vsel %vm178, %v335, %v334
    %338 = vmatpush.xpose.msra.mxu0 0.0
    %339 = vmatpush.xpose.msra.mxu0 0.0
    %340 = vmatpush.xpose.msra.mxu0 0.0
    %341 = vmatpush.xpose.msra.mxu0 0.0
    %342 = vmatpush.xpose.msra.mxu0 0.0
    %343 = vmatpush.xpose.msra.mxu0 0.0
    %344 = vmatpush.xpose.msra.mxu0 0.0
    %345 = vmatpush.xpose.msra.mxu0 0.0
    %346 = vmatpush.xpose.msra.mxu0 0.0
    %347 = vmatpush.xpose.msra.mxu0 0.0
    %348 = vmatpush.xpose.msra.mxu0 0.0
    %349 = vmatpush.xpose.msra.mxu0 0.0
    %350 = vmatpush.xpose.msra.mxu0 0.0
    %351 = vmatpush.xpose.msra.mxu0 0.0
    %352 = vmatpush.xpose.msra.mxu0 %v333
    %353 = vmatpush.xpose.msra.mxu0 %v332
    %354 = vmatmul.f32.gmra.mxu0 %v336
    %v355 = vpop.f32.mrf.mxu0
    %v356 = vadd.f32 0.0, %v355
    %357 = vdwg.mxu0
    %v358 = vadd.f32 %v331, %v356
    %v359 = vld [vmem:[#allocation2 + $0x38] sm:$0xff]
    %v360 = vld [vmem:[#allocation2 + $0x78] sm:$0x3]
    %v361 = vrot.slane %v165, 7
    %v362 = vrot.slane %v166, 6
    %v363 = vsel %vm178, %v362, %v361
    %365 = vmatpush.xpose.msra.mxu0 0.0
    %366 = vmatpush.xpose.msra.mxu0 0.0
    %367 = vmatpush.xpose.msra.mxu0 0.0
    %368 = vmatpush.xpose.msra.mxu0 0.0
    %369 = vmatpush.xpose.msra.mxu0 0.0
    %370 = vmatpush.xpose.msra.mxu0 0.0
    %371 = vmatpush.xpose.msra.mxu0 0.0
    %372 = vmatpush.xpose.msra.mxu0 0.0
    %373 = vmatpush.xpose.msra.mxu0 0.0
    %374 = vmatpush.xpose.msra.mxu0 0.0
    %375 = vmatpush.xpose.msra.mxu0 0.0
    %376 = vmatpush.xpose.msra.mxu0 0.0
    %377 = vmatpush.xpose.msra.mxu0 0.0
    %378 = vmatpush.xpose.msra.mxu0 0.0
    %379 = vmatpush.xpose.msra.mxu0 %v360
    %380 = vmatpush.xpose.msra.mxu0 %v359
    %381 = vmatmul.f32.gmra.mxu0 %v363
    %v382 = vpop.f32.mrf.mxu0
    %v383 = vadd.f32 0.0, %v382
    %384 = vdwg.mxu0
    %v385 = vadd.f32 %v358, %v383
    %v386 = vld [vmem:[%s2] sm:$0x1]
    %v388 = vperm.slane %v386, 0
    %v390 = vadd.f32 %v385, %v388
    %vm391 = vcmask 74752
    %392 = vst.msk [vmem:[#allocation7] sm:$0x3] %vm391, %v390
    // Predicated region
    $region37: #{quantized_classifier_fwd.1} parent=1 // pred_check
      _
    $region38: #{quantized_classifier_fwd.1} parent=1 // pred_check_branch
      %394 = sbr.rel (0) target = $region40
    $region39: #{quantized_classifier_fwd.1} parent=1 // pred_region
      %396 = vsyncadd [#allocation5], 0
      %s398 = sshll.u32 [#allocation7], 4
      %s399 = int_to_ptr.vmem [resolvable:$true] %s398
      %s400 = sshll.u32 %s4, 4
      %s401 = int_to_ptr.hbm [resolvable:$true] %s400
      %403 = dma.vmem_to_hbm [thread:$0]  %s399, 32, %s401, [#allocation5]
    $region40: #{quantized_classifier_fwd.1} parent=1 // pred_fallthru
      _
    // Predicated region
    $region41: #{quantized_classifier_fwd.1} parent=1 // pred_check
      _
    $region42: #{quantized_classifier_fwd.1} parent=1 // pred_check_branch
      %405 = sbr.rel (0) target = $region44
    $region43: #{quantized_classifier_fwd.1} parent=1 // pred_region
      %407 = dma.done [#allocation5], 32
    $region44: #{quantized_classifier_fwd.1} parent=1 // pred_fallthru
      _
    %408 = vsyncpa [#allocation5], 1
    %409 = vsyncpa [#allocation6], 1
  %410 = vsyncmov [#allocation3]
  %s411 = vpop.sfrf %410
  %p412 = scmp.eq.s32.totalorder %s411, 0
  %p413 = pneg %p412
  %415 = shalt.err (%p413)

</llo_original>
